<compile_context>
chip_gen: v6e
topology: v6e:2x2x1
jax: 0.10.0
libtpu: 0.0.40
codegen_flags: <defaults>
</compile_context>

<pallas_src>
import functools
from math import isqrt

import jax
import jax.numpy as jnp
from jax import lax
from jax.experimental import pallas as pl
from jax.experimental.pallas import tpu as pltpu

_MIB = 1024 * 1024

# Generation-aware per-block budget for the streaming x/out blocks. Worst-case
# double-buffered working set is ~6x this (x, out, pe each double-buffered).
_BLOCK_BUDGET = {"v7": 7 * _MIB, "v6": 8 * _MIB, "v5": 4 * _MIB}
_DEFAULT_BUDGET = 4 * _MIB
_VMEM_CAP = {"v7": 48 * _MIB}     # v7x physical VMEM is 64 MiB per TensorCore
_DEFAULT_VMEM_CAP = 100 * _MIB    # v5e / v6e have 128 MiB physical VMEM


def _tpu_generation():
    try:
        kind = jax.devices()[0].device_kind.lower()
    except Exception:
        return None
    for gen in ("v7", "v6", "v5"):
        if gen in kind:
            return gen
    return None


def _round_down(n, m):
    return (n // m) * m


def _choose_tiles_3d(B, T, D, itemsize, budget):
    """(Bb, TT) for (Bb, TT, D) blocks: big, sublane-aligned, <= budget."""
    min_sub = max(8, 32 // itemsize)            # 8 f32 / 16 bf16 / 32 int8
    row_bytes = D * itemsize
    if T < min_sub:
        TT = T                                  # full extent is the only legal tile
    else:
        tt_budget = _round_down(max(budget // row_bytes, min_sub), min_sub)
        TT = max(min(tt_budget, _round_down(T, min_sub)), min_sub)
    Bb = min(B, max(1, budget // (TT * row_bytes)))
    return Bb, TT


def _choose_tile_flat(B, F, itemsize, budget):
    """Lane-dense flat tile Ff for (B, Ff) blocks over the reshaped (B, T*D)."""
    if F <= 128:
        return F
    ff_budget = _round_down(max(budget // (B * itemsize), 128), 128)
    return min(ff_budget, _round_down(F, 128))


# --------------------------------------------------------------------------
# In-kernel hash RNG (plain VPU integer ops -> works compiled and interpreted)
# --------------------------------------------------------------------------
_GOLDEN_I32 = -1640531527          # 0x9E3779B9 as two's-complement int32
_MIX1 = 0x7FEB352D
_MIX2 = 0x846CA68B


def _splitmix32(lin_i32, seed_i32):
    """Avalanche hash of a global linear element index; uniform uint32 output."""
    u = (lin_i32 + seed_i32 * _GOLDEN_I32).astype(jnp.uint32)
    u = (u ^ (u >> 16)) * jnp.uint32(_MIX1)
    u = (u ^ (u >> 15)) * jnp.uint32(_MIX2)
    return u ^ (u >> 16)


# --------------------------------------------------------------------------
# Pallas kernels
# --------------------------------------------------------------------------
def _pe_add_kernel(x_ref, pe_ref, o_ref):
    # pe block has a leading 1-dim; broadcasts over the batch rows of x.
    o_ref[...] = x_ref[...] + pe_ref[...]


def _pe_add_dropout_kernel(seed_ref, x_ref, pe_ref, o_ref, *, p_dropout, dims):
    # Matches torch.nn.Dropout in train mode: keep w.p. (1-p), scale by 1/(1-p).
    y = x_ref[...] + pe_ref[...]
    shape = y.shape
    # Global linear element index -> mask is independent of the tiling choice.
    if len(shape) == 3:                         # (Bb, TT, D) blocks, grid (t, b)
        _, T_full, D_full = dims
        b0 = pl.program_id(1) * shape[0]
        t0 = pl.program_id(0) * shape[1]
        bi = lax.broadcasted_iota(jnp.int32, shape, 0) + b0
        ti = lax.broadcasted_iota(jnp.int32, shape, 1) + t0
        di = lax.broadcasted_iota(jnp.int32, shape, 2)
        lin = (bi * T_full + ti) * D_full + di
    else:                                       # (B, Ff) flat blocks, grid (f,)
        _, F_full = dims
        f0 = pl.program_id(0) * shape[1]
        bi = lax.broadcasted_iota(jnp.int32, shape, 0)
        fi = lax.broadcasted_iota(jnp.int32, shape, 1) + f0
        lin = bi * F_full + fi
    bits = _splitmix32(lin, seed_ref[0])
    # Integer threshold compare keeps the VPU path free of u32->f32 converts.
    thresh = min(int(round(p_dropout * 4294967296.0)), 4294967295)
    keep = bits >= jnp.uint32(thresh)
    scale = jnp.asarray(1.0 / (1.0 - p_dropout), dtype=y.dtype)
    o_ref[...] = (jnp.where(keep, y, jnp.zeros_like(y)) * scale).astype(o_ref.dtype)


# --------------------------------------------------------------------------
# Module-equivalent wrapper
# --------------------------------------------------------------------------
class LearnablePositionalEncoding:
    def __init__(self, n_tokens: int, latent_dim: int, p_dropout: float = 0.0,
                 *, key=None, dtype=jnp.float32, donate_x: bool = False):
        if not 0.0 <= float(p_dropout) <= 1.0:
            raise ValueError("p_dropout must be in [0, 1]")
        if key is None:
            key = jax.random.PRNGKey(0)
        # torch.randn(1, n_tokens, latent_dim) * 0.02 (deterministic synthetic init)
        self.pos_enc = (jax.random.normal(key, (1, n_tokens, latent_dim),
                                          dtype=jnp.float32) * 0.02).astype(dtype)
        self.n_tokens = n_tokens
        self.latent_dim = latent_dim
        self.p_dropout = float(p_dropout)
        self.donate_x = donate_x          # optional: alias x into the output buffer

    # ---- glue: bicubic resampling of the positional grid (plain JAX) ----
    def resample_pos_enc(self, new_n_tokens: int):
        new_hw = isqrt(new_n_tokens)
        old_hw = isqrt(self.pos_enc.shape[1])
        if (new_hw * new_hw != new_n_tokens
                or old_hw * old_hw != self.pos_enc.shape[1]):
            raise ValueError("resample_pos_enc requires perfect-square token counts")
        orig_dtype = self.pos_enc.dtype
        pe = self.pos_enc.astype(jnp.float32).reshape(1, old_hw, old_hw, self.latent_dim)
        # TODO(synk): jax.image.resize 'cubic' approximates F.interpolate
        # (mode='bicubic', antialias=True); semantically equivalent, not bit-exact.
        pe = jax.image.resize(pe, (1, new_hw, new_hw, self.latent_dim), method="cubic")
        return pe.reshape(1, new_hw * new_hw, self.latent_dim).astype(orig_dtype)

    # ---- hot path: Pallas broadcast add (+ optional dropout) ----
    def __call__(self, x, *, dropout_seed: int = 0, train: bool = True,
                 block_budget_bytes: int | None = None):
        B, T, D = x.shape
        pos_enc = self.pos_enc if T == self.n_tokens else self.resample_pos_enc(T)
        pos_enc = pos_enc.astype(x.dtype)

        use_dropout = train and self.p_dropout > 0.0
        if use_dropout and self.p_dropout >= 1.0:
            return jnp.zeros_like(x)      # torch.nn.Dropout(p=1.0) zeros everything

        itemsize = jnp.dtype(x.dtype).itemsize
        gen = _tpu_generation()
        budget = block_budget_bytes or _BLOCK_BUDGET.get(gen, _DEFAULT_BUDGET)
        min_sub = max(8, 32 // itemsize)

        if D % 128 == 0:
            # 3-D path: already lane-dense. Batch is the innermost ('arbitrary')
            # grid axis, so the constant pe block index is revisited sequentially
            # and its DMA is issued once per token tile (no B-fold re-fetch).
            Bb, TT = _choose_tiles_3d(B, T, D, itemsize, budget)
            if gen == "v7" and pl.cdiv(T, TT) < 2 and TT >= 2 * min_sub:
                # v7x has 2 TensorCores: give the parallel token axis >= 2 steps.
                TT = _round_down(TT // 2, min_sub)
            grid = (pl.cdiv(T, TT), pl.cdiv(B, Bb))
            x_in, pe_in = x, pos_enc
            x_block, pe_block = (Bb, TT, D), (1, TT, D)
            dims = (B, T, D)
            semantics = ("parallel", "arbitrary")
            if use_dropout:
                x_map = lambda t, b, seed: (b, t, 0)
                pe_map = lambda t, b, seed: (0, t, 0)
            else:
                x_map = lambda t, b: (b, t, 0)
                pe_map = lambda t, b: (0, t, 0)
        else:
            # Flat 2-D path: D is not lane-aligned, so merge (T, D) -> T*D and
            # block the flat axis in multiples of 128 lanes. Elementwise add /
            # dropout are bit-exact under this reshape; avoids masked vst stores.
            # TODO(synk): when B < 8 the (B, Ff) block underfills sublanes; a
            # batch-folding repack would need a non-free relayout, skipped.
            F = T * D
            Ff = _choose_tile_flat(B, F, itemsize, budget)
            if gen == "v7" and pl.cdiv(F, Ff) < 2 and Ff >= 256:
                Ff = _round_down(Ff // 2, 128)
            grid = (pl.cdiv(F, Ff),)
            x_in, pe_in = x.reshape(B, F), pos_enc.reshape(1, F)
            x_block, pe_block = (B, Ff), (1, Ff)
            dims = (B, F)
            semantics = ("parallel",)
            if use_dropout:
                x_map = lambda f, seed: (0, f)
                pe_map = x_map
            else:
                x_map = lambda f: (0, f)
                pe_map = x_map

        x_spec = pl.BlockSpec(x_block, x_map)
        pe_spec = pl.BlockSpec(pe_block, pe_map)
        out_spec = pl.BlockSpec(x_block, x_map)
        out_shape = jax.ShapeDtypeStruct(x_in.shape, x.dtype)

        # Explicit scoped-VMEM limit sized from the actual double-buffered
        # working set (x, out, pe), capped under the generation's physical VMEM.
        block_bytes = itemsize
        for d_ in x_block:
            block_bytes *= d_
        pe_bytes = itemsize
        for d_ in pe_block:
            pe_bytes *= d_
        working_set = 2 * (2 * block_bytes + pe_bytes)
        vmem_limit = int(min(_VMEM_CAP.get(gen, _DEFAULT_VMEM_CAP),
                             max(32 * _MIB, working_set + 8 * _MIB)))
        cparams = pltpu.CompilerParams(dimension_semantics=semantics,
                                       vmem_limit_bytes=vmem_limit)
        cost = pl.CostEstimate(flops=B * T * D, transcendentals=0,
                               bytes_accessed=(2 * B + 1) * T * D * itemsize)

        if not use_dropout:
            out = pl.pallas_call(
                _pe_add_kernel,
                out_shape=out_shape,
                grid_spec=pltpu.PrefetchScalarGridSpec(
                    num_scalar_prefetch=0, grid=grid,
                    in_specs=[x_spec, pe_spec], out_specs=out_spec),
                compiler_params=cparams,
                cost_estimate=cost,
                input_output_aliases={0: 0} if self.donate_x else {},
            )(x_in, pe_in)
        else:
            seed = jnp.asarray([dropout_seed], dtype=jnp.int32)
            kernel = functools.partial(_pe_add_dropout_kernel,
                                       p_dropout=self.p_dropout, dims=dims)
            out = pl.pallas_call(
                kernel,
                out_shape=out_shape,
                grid_spec=pltpu.PrefetchScalarGridSpec(
                    num_scalar_prefetch=1, grid=grid,
                    in_specs=[x_spec, pe_spec], out_specs=out_spec),
                compiler_params=cparams,
                cost_estimate=cost,
                # x is operand 1 (operand 0 is the scalar-prefetch seed).
                input_output_aliases={1: 0} if self.donate_x else {},
            )(seed, x_in, pe_in)
        return out.reshape(B, T, D)


# --------------------------------------------------------------------------
# Demo / self-test
# --------------------------------------------------------------------------
if __name__ == "__main__":
    key = jax.random.PRNGKey(0)
    k_param, k_x = jax.random.split(key)

    # --- main path: no dropout (module default p_dropout=0.0) ---
    B, T, D = 2, 64, 128
    x = jax.random.normal(k_x, (B, T, D), dtype=jnp.float32)
    module = LearnablePositionalEncoding(n_tokens=T, latent_dim=D,
                                         p_dropout=0.0, key=k_param)
    out = jax.block_until_ready(module(x))
    assert out.shape == (B, T, D) and out.dtype == x.dtype
    assert jnp.allclose(out, x + module.pos_enc, atol=1e-6), "add path mismatch"

    # --- ragged cdiv tiling path (tiny budget forces multiple uneven blocks) ---
    B2, T2, D2 = 2, 72, 128
    x2 = jax.random.normal(jax.random.PRNGKey(1), (B2, T2, D2), dtype=jnp.float32)
    mod2 = LearnablePositionalEncoding(n_tokens=T2, latent_dim=D2,
                                       p_dropout=0.0, key=k_param)
    out2 = jax.block_until_ready(mod2(x2, block_budget_bytes=16 * 1024))
    assert jnp.allclose(out2, x2 + mod2.pos_enc, atol=1e-6), "ragged path mismatch"

    # --- lane-dense flat path (D not a multiple of 128) ---
    B3, T3, D3 = 2, 16, 96
    x3 = jax.random.normal(jax.random.PRNGKey(2), (B3, T3, D3), dtype=jnp.float32)
    mod3 = LearnablePositionalEncoding(n_tokens=T3, latent_dim=D3,
                                       p_dropout=0.0, key=k_param)
    out3 = jax.block_until_ready(mod3(x3))
    assert jnp.allclose(out3, x3 + mod3.pos_enc, atol=1e-6), "flat path mismatch"

    # --- dropout path smoke test ---
    p = 0.25
    mod_drop = LearnablePositionalEncoding(n_tokens=T, latent_dim=D,
                                           p_dropout=p, key=k_param)
    out_d = jax.block_until_ready(mod_drop(x, dropout_seed=123, train=True))
    assert out_d.shape == (B, T, D) and out_d.dtype == x.dtype
    ref_scaled = (x + mod_drop.pos_enc) * (1.0 / (1.0 - p))
    zero_frac = float(jnp.mean((out_d == 0).astype(jnp.float32)))
    assert 0.10 < zero_frac < 0.40, f"dropout zero fraction off: {zero_frac}"
    kept_ok = jnp.all(jnp.where(out_d == 0, True,
                                jnp.abs(out_d - ref_scaled) < 1e-4))
    assert bool(kept_ok), "kept values mismatch (dropout path)"

    # --- eval mode disables dropout ---
    out_e = jax.block_until_ready(mod_drop(x, train=False))
    assert jnp.allclose(out_e, x + mod_drop.pos_enc, atol=1e-6), "eval path mismatch"

    print("KERNEL_OK")
</pallas_src>

<mosaic_0001>
module attributes {stable_mosaic.version = 11 : i64} {
  func.func @_pe_add_kernel(%arg0: i32, %arg1: i32, %arg2: memref<2x64x128xf32, #tpu.memory_space<vmem>>, %arg3: memref<1x64x128xf32, #tpu.memory_space<vmem>>, %arg4: memref<2x64x128xf32, #tpu.memory_space<vmem>>) attributes {dimension_semantics = [#tpu.dimension_semantics<parallel>, #tpu.dimension_semantics<arbitrary>], iteration_bounds = array<i64: 1, 1>, scalar_prefetch = 0 : i64, scratch_operands = 0 : i64, tpu.core_type = #tpu.core_type<tc>, window_params = [{transform_indices = @transform_0, window_bounds = array<i64: 2, 64, 128>}, {transform_indices = @transform_1, window_bounds = array<i64: 1, 64, 128>}, {transform_indices = @transform_2, window_bounds = array<i64: 2, 64, 128>}]} {
    %c0 = arith.constant 0 : index
    %c0_0 = arith.constant 0 : index
    %c0_1 = arith.constant 0 : index
    %0 = vector.load %arg2[%c0, %c0_0, %c0_1] : memref<2x64x128xf32, #tpu.memory_space<vmem>>, vector<2x64x128xf32>
    %c0_2 = arith.constant 0 : index
    %c0_3 = arith.constant 0 : index
    %c0_4 = arith.constant 0 : index
    %1 = vector.load %arg3[%c0_2, %c0_3, %c0_4] : memref<1x64x128xf32, #tpu.memory_space<vmem>>, vector<1x64x128xf32>
    %2 = vector.broadcast %1 : vector<1x64x128xf32> to vector<2x64x128xf32>
    %3 = arith.addf %0, %2 : vector<2x64x128xf32>
    %c0_5 = arith.constant 0 : index
    %c0_6 = arith.constant 0 : index
    %c0_7 = arith.constant 0 : index
    %4 = vector.load %arg4[%c0_5, %c0_6, %c0_7] : memref<2x64x128xf32, #tpu.memory_space<vmem>>, vector<2x64x128xf32>
    tpu.vector_store %arg4[%c0_5, %c0_6, %c0_7], %3 {strides = array<i32>} : memref<2x64x128xf32, #tpu.memory_space<vmem>>, vector<2x64x128xf32>,
    return
  }
  func.func @transform_0(%arg0: i32, %arg1: i32) -> (i32, i32, i32) {
    %c0_i32 = arith.constant 0 : i32
    %c0_i32_0 = arith.constant 0 : i32
    return %arg1, %arg0, %c0_i32 : i32, i32, i32
  }
  func.func @transform_1(%arg0: i32, %arg1: i32) -> (i32, i32, i32) {
    %c0_i32 = arith.constant 0 : i32
    %c0_i32_0 = arith.constant 0 : i32
    %c0_i32_1 = arith.constant 0 : i32
    return %c0_i32, %arg0, %c0_i32_0 : i32, i32, i32
  }
  func.func @transform_2(%arg0: i32, %arg1: i32) -> (i32, i32, i32) {
    %c0_i32 = arith.constant 0 : i32
    %c0_i32_0 = arith.constant 0 : i32
    return %arg1, %arg0, %c0_i32 : i32, i32, i32
  }
}

</mosaic_0001>

<llo_original>
// kernel: tpu_custom_call.1
$region0: #{tpu_custom_call.1}
  #allocation0 [shape = 'u32[]', space=smem, size = 0x4, offset = 0x4, fixed_abs, tag = 'smem constant byte address 0x4 - core index']
  #allocation1 [shape = 'u32[144,128]{1,0:T(1,128)}', space=vmem, size = 0x12000, scoped, tag = 'internal scratch']
  %s0 = inlined_call_operand.hbm [shape: f32[2,64,128], index: 0, kind: input, shape index: {}]
  %s1 = inlined_call_operand.hbm [shape: f32[1,64,128], index: 1, kind: input, shape index: {}]
  %s2 = inlined_call_operand.hbm [shape: f32[2,64,128], index: 2, kind: output, shape index: {}]
  %s3 = sld [smem:[#allocation0]]
  $region26: #{tpu_custom_call.1} parent=0
    _
  %s5 = ssub.s32 1, %s3
  %s6 = scalar_select 0, %s5, %s3
  $region1: #{tpu_custom_call.1} parent=0
    #allocation2 [shape = 'u8[65536]{0}', space=vmem, size = 0x10000, scoped, tag = 'input window, operand 0, single buffered']
    #allocation3 [shape = 's32[1]{0}', space=sflag, size = 0x4, scoped, tag = 'scoped memory for tpu_custom_call.1']
    #allocation4 [shape = 's32[1]{0}', space=sflag, size = 0x4, scoped, tag = 'scoped memory for tpu_custom_call.1']
    #allocation5 [shape = 'u8[32768]{0}', space=vmem, size = 0x8000, scoped, tag = 'input window, operand 1, single buffered']
    #allocation6 [shape = 's32[1]{0}', space=sflag, size = 0x4, scoped, tag = 'scoped memory for tpu_custom_call.1']
    #allocation7 [shape = 'u8[65536]{0}', space=vmem, size = 0x10000, scoped, tag = 'output window, operand 0, single buffered']
    %7 = vsyncpa [#allocation3], 0
    %8 = vsyncpa [#allocation6], 0
    %9 = vsyncpa [#allocation4], 0
    // Predicated region
    $region2: #{tpu_custom_call.1} parent=1 // pred_check
      _
    $region3: #{tpu_custom_call.1} parent=1 // pred_check_branch
      %11 = sbr.rel (0) target = $region5
    $region4: #{tpu_custom_call.1} parent=1 // pred_region
      %s13 = ssub.s32 2048, 2048
      %14 = vsyncadd [#allocation3], %s13
      %s15 = sshll.u32 [#allocation2], 4
      %s16 = int_to_ptr.vmem [resolvable:$true] %s15
      %21 = dma.hbm_to_vmem [thread:$0]  %s0, 2048, %s16, [#allocation3], 128, 128, 8
    $region5: #{tpu_custom_call.1} parent=1 // pred_fallthru
      _
    // Predicated region
    $region6: #{tpu_custom_call.1} parent=1 // pred_check
      _
    $region7: #{tpu_custom_call.1} parent=1 // pred_check_branch
      %23 = sbr.rel (0) target = $region9
    $region8: #{tpu_custom_call.1} parent=1 // pred_region
      %s25 = ssub.s32 1024, 1024
      %26 = vsyncadd [#allocation6], %s25
      %s27 = sshll.u32 [#allocation5], 4
      %s28 = int_to_ptr.vmem [resolvable:$true] %s27
      %33 = dma.hbm_to_vmem [thread:$0]  %s1, 1024, %s28, [#allocation6], 128, 128, 8
    $region9: #{tpu_custom_call.1} parent=1 // pred_fallthru
      _
    // Predicated region
    $region10: #{tpu_custom_call.1} parent=1 // pred_check
      _
    $region11: #{tpu_custom_call.1} parent=1 // pred_check_branch
      %35 = sbr.rel (0) target = $region13
    $region12: #{tpu_custom_call.1} parent=1 // pred_region
      %36 = dma.done [#allocation3], 2048
    $region13: #{tpu_custom_call.1} parent=1 // pred_fallthru
      _
    // Predicated region
    $region14: #{tpu_custom_call.1} parent=1 // pred_check
      _
    $region15: #{tpu_custom_call.1} parent=1 // pred_check_branch
      %38 = sbr.rel (0) target = $region17
    $region16: #{tpu_custom_call.1} parent=1 // pred_region
      %39 = dma.done [#allocation6], 1024
    $region17: #{tpu_custom_call.1} parent=1 // pred_fallthru
      _
    %v40 = vld [vmem:[#allocation2] sm:$0xff]
    %v41 = vld [vmem:[#allocation2 + $0x8] sm:$0xff]
    %v42 = vld [vmem:[#allocation2 + $0x10] sm:$0xff]
    %v43 = vld [vmem:[#allocation2 + $0x18] sm:$0xff]
    %v44 = vld [vmem:[#allocation2 + $0x20] sm:$0xff]
    %v45 = vld [vmem:[#allocation2 + $0x28] sm:$0xff]
    %v46 = vld [vmem:[#allocation2 + $0x30] sm:$0xff]
    %v47 = vld [vmem:[#allocation2 + $0x38] sm:$0xff]
    %v48 = vld [vmem:[#allocation2 + $0x40] sm:$0xff]
    %v49 = vld [vmem:[#allocation2 + $0x48] sm:$0xff]
    %v50 = vld [vmem:[#allocation2 + $0x50] sm:$0xff]
    %v51 = vld [vmem:[#allocation2 + $0x58] sm:$0xff]
    %v52 = vld [vmem:[#allocation2 + $0x60] sm:$0xff]
    %v53 = vld [vmem:[#allocation2 + $0x68] sm:$0xff]
    %v54 = vld [vmem:[#allocation2 + $0x70] sm:$0xff]
    %v55 = vld [vmem:[#allocation2 + $0x78] sm:$0xff]
    %v56 = vld [vmem:[#allocation5] sm:$0xff]
    %v57 = vld [vmem:[#allocation5 + $0x8] sm:$0xff]
    %v58 = vld [vmem:[#allocation5 + $0x10] sm:$0xff]
    %v59 = vld [vmem:[#allocation5 + $0x18] sm:$0xff]
    %v60 = vld [vmem:[#allocation5 + $0x20] sm:$0xff]
    %v61 = vld [vmem:[#allocation5 + $0x28] sm:$0xff]
    %v62 = vld [vmem:[#allocation5 + $0x30] sm:$0xff]
    %v63 = vld [vmem:[#allocation5 + $0x38] sm:$0xff]
    %v64 = vadd.f32 %v40, %v56
    %v65 = vadd.f32 %v41, %v57
    %v66 = vadd.f32 %v42, %v58
    %v67 = vadd.f32 %v43, %v59
    %v68 = vadd.f32 %v44, %v60
    %v69 = vadd.f32 %v45, %v61
    %v70 = vadd.f32 %v46, %v62
    %v71 = vadd.f32 %v47, %v63
    %v72 = vadd.f32 %v48, %v56
    %v73 = vadd.f32 %v49, %v57
    %v74 = vadd.f32 %v50, %v58
    %v75 = vadd.f32 %v51, %v59
    %v76 = vadd.f32 %v52, %v60
    %v77 = vadd.f32 %v53, %v61
    %v78 = vadd.f32 %v54, %v62
    %v79 = vadd.f32 %v55, %v63
    %80 = vst [vmem:[#allocation7] sm:$0xff] %v64
    %81 = vst [vmem:[#allocation7 + $0x8] sm:$0xff] %v65
    %82 = vst [vmem:[#allocation7 + $0x10] sm:$0xff] %v66
    %83 = vst [vmem:[#allocation7 + $0x18] sm:$0xff] %v67
    %84 = vst [vmem:[#allocation7 + $0x20] sm:$0xff] %v68
    %85 = vst [vmem:[#allocation7 + $0x28] sm:$0xff] %v69
    %86 = vst [vmem:[#allocation7 + $0x30] sm:$0xff] %v70
    %87 = vst [vmem:[#allocation7 + $0x38] sm:$0xff] %v71
    %88 = vst [vmem:[#allocation7 + $0x40] sm:$0xff] %v72
    %89 = vst [vmem:[#allocation7 + $0x48] sm:$0xff] %v73
    %90 = vst [vmem:[#allocation7 + $0x50] sm:$0xff] %v74
    %91 = vst [vmem:[#allocation7 + $0x58] sm:$0xff] %v75
    %92 = vst [vmem:[#allocation7 + $0x60] sm:$0xff] %v76
    %93 = vst [vmem:[#allocation7 + $0x68] sm:$0xff] %v77
    %94 = vst [vmem:[#allocation7 + $0x70] sm:$0xff] %v78
    %95 = vst [vmem:[#allocation7 + $0x78] sm:$0xff] %v79
    // Predicated region
    $region18: #{tpu_custom_call.1} parent=1 // pred_check
      _
    $region19: #{tpu_custom_call.1} parent=1 // pred_check_branch
      %97 = sbr.rel (0) target = $region21
    $region20: #{tpu_custom_call.1} parent=1 // pred_region
      %s99 = ssub.s32 2048, 2048
      %100 = vsyncadd [#allocation4], %s99
      %s101 = sshll.u32 [#allocation7], 4
      %s102 = int_to_ptr.vmem [resolvable:$true] %s101
      %107 = dma.vmem_to_hbm [thread:$0]  %s102, 2048, %s2, [#allocation4], 128, 128, 8
    $region21: #{tpu_custom_call.1} parent=1 // pred_fallthru
      _
    // Predicated region
    $region22: #{tpu_custom_call.1} parent=1 // pred_check
      _
    $region23: #{tpu_custom_call.1} parent=1 // pred_check_branch
      %109 = sbr.rel (0) target = $region25
    $region24: #{tpu_custom_call.1} parent=1 // pred_region
      %110 = dma.done [#allocation4], 2048
    $region25: #{tpu_custom_call.1} parent=1 // pred_fallthru
      _
    %111 = vsyncpa [#allocation3], 1
    %112 = vsyncpa [#allocation6], 1
    %113 = vsyncpa [#allocation4], 1

</llo_original>
